<compile_context>
chip_gen: v7x
topology: tpu7x:2x2x1
jax: 0.10.0
libtpu: 0.0.40
codegen_flags: <defaults>
</compile_context>

<pallas_src>
import jax
import jax.numpy as jnp
import numpy as np
from jax.experimental import pallas as pl
from jax.experimental.pallas import tpu as pltpu


def _interp_matrix(out_size: int, in_size: int) -> np.ndarray:
    """Row-stochastic 1-D linear interpolation matrix, align_corners=True."""
    if out_size == 1:
        src = np.zeros((1,), np.float32)
    else:
        src = np.arange(out_size, dtype=np.float32) * (
            (in_size - 1) / (out_size - 1)
        )
    i0 = np.clip(np.floor(src).astype(np.int32), 0, in_size - 1)
    i1 = np.minimum(i0 + 1, in_size - 1)
    frac = (src - i0).astype(np.float32)
    m = np.zeros((out_size, in_size), np.float32)
    m[np.arange(out_size), i0] += 1.0 - frac
    m[np.arange(out_size), i1] += frac
    return m


def _fusion_kernel(x1_ref, x2_ref, w1_ref, w2_ref, b1_ref, b2_ref, a_ref, o_ref):
    # Block shapes (per grid step, Bn batches):
    #   x1 (Bn, Cd, P1) bf16     x2 (Bn, Cs, P2) bf16
    #   w1 (Cd, Cd) bf16         w2 (Cd, Cs) bf16
    #   b1, b2 (Cd, 1) f32       a (P2, P1) bf16   (dense bilinear operator)
    #   o  (Bn, Cd, P1) f32
    bn = x1_ref.shape[0]
    w1 = w1_ref[...]
    w2 = w2_ref[...]
    a = a_ref[...]
    b1 = b1_ref[...]
    b2 = b2_ref[...]
    # Static loop over the (small) batch block; every iteration is three clean
    # 2-D MXU matmuls and one full-width lane-dense store of a (Cd, P1) tile.
    for b in range(bn):
        y1 = jnp.dot(w1, x1_ref[b], preferred_element_type=jnp.float32) + b1
        y2 = jnp.dot(w2, x2_ref[b], preferred_element_type=jnp.float32) + b2
        z = jnp.dot(y2.astype(jnp.bfloat16), a,
                    preferred_element_type=jnp.float32)      # (Cd, P1)
        v = y1 + z
        o_ref[b] = jnp.maximum(v, 0.2 * v).astype(o_ref.dtype)


def _pick_batch_block(n: int) -> int:
    """Batches per grid step: amortize per-step overhead, keep >=2 grid steps."""
    for bn in (16, 8, 4, 2):
        if n % bn == 0 and n // bn >= 2:
            return bn
    return 1


def fusion_block_pallas(x1, x2, w1, b1, w2, b2):
    """FusionBlock forward.

    x1: (N, Cd, H1, W1) NCHW, x2: (N, Cs, H2, W2) NCHW.
    w1: (Cd, Cd), b1: (Cd,)  -- conv1 (Cout, Cin), 1x1 kernel squeezed.
    w2: (Cd, Cs), b2: (Cd,)  -- conv2 (Cout, Cin).
    Returns (N, Cd, H1, W1), matching the PyTorch module.
    """
    N, Cd, H1, W1 = x1.shape
    _, Cs, H2, W2 = x2.shape
    P1, P2 = H1 * W1, H2 * W2

    # Dense bilinear (align_corners=True) operator applied on the right of the
    # flattened (row-major) small feature map: z_flat = y2_flat @ A,
    # A = kron(Ah, Aw)^T, shape (P2, P1). Small feature maps only (~32 KB here).
    ah = _interp_matrix(H1, H2)
    aw = _interp_matrix(W1, W2)
    a = jnp.asarray(np.kron(ah, aw).T, dtype=jnp.bfloat16)   # (P2, P1)

    cdt = jnp.bfloat16
    x1f = x1.reshape(N, Cd, P1).astype(cdt)      # free NCHW view + cast
    x2f = x2.reshape(N, Cs, P2).astype(cdt)      # lane axis = H2*W2
    w1c = w1.astype(cdt)
    w2c = w2.astype(cdt)
    b1c = b1.astype(jnp.float32).reshape(Cd, 1)
    b2c = b2.astype(jnp.float32).reshape(Cd, 1)

    bn = _pick_batch_block(N)
    grid = (N // bn,)

    out_dtype = x1.dtype
    out_bytes = np.dtype(out_dtype).itemsize

    flops = 2 * N * (Cd * Cd * P1 + Cd * Cs * P2 + Cd * P2 * P1)
    bytes_accessed = (
        N * Cd * P1 * 2 + N * Cs * P2 * 2
        + (Cd * Cd + Cd * Cs + P2 * P1) * 2 + 2 * Cd * 4
        + N * Cd * P1 * out_bytes
    )
    cost = pl.CostEstimate(flops=flops, transcendentals=0,
                           bytes_accessed=bytes_accessed)

    # Per-step VMEM footprint (double-buffered I/O blocks + weights + live f32
    # intermediates), capped generation-aware (v7x: 64 MiB/TC vs 128 MiB).
    step_bytes = (
        2 * bn * (Cd * P1 * 2 + Cs * P2 * 2)          # input blocks (bf16, x2 bufs)
        + 2 * bn * Cd * P1 * out_bytes                # output blocks
        + (Cd * Cd + Cd * Cs + P2 * P1) * 2 + 2 * Cd * 4
        + (3 * Cd * P1 + Cd * P2) * 4                 # live f32 intermediates
    )
    try:
        vmem_cap = pltpu.get_tpu_info().vmem_capacity_bytes
    except Exception:
        vmem_cap = 64 * 2**20                         # conservative (v7x per-TC)
    vmem_limit = int(min(vmem_cap // 2, max(16 * 2**20, 4 * step_bytes)))

    out = pl.pallas_call(
        _fusion_kernel,
        out_shape=jax.ShapeDtypeStruct((N, Cd, P1), out_dtype),
        grid_spec=pltpu.PrefetchScalarGridSpec(
            num_scalar_prefetch=0,
            grid=grid,
            in_specs=[
                pl.BlockSpec((bn, Cd, P1), lambda n: (n, 0, 0)),
                pl.BlockSpec((bn, Cs, P2), lambda n: (n, 0, 0)),
                pl.BlockSpec((Cd, Cd), lambda n: (0, 0)),
                pl.BlockSpec((Cd, Cs), lambda n: (0, 0)),
                pl.BlockSpec((Cd, 1), lambda n: (0, 0)),
                pl.BlockSpec((Cd, 1), lambda n: (0, 0)),
                pl.BlockSpec((P2, P1), lambda n: (0, 0)),
            ],
            out_specs=pl.BlockSpec((bn, Cd, P1), lambda n: (n, 0, 0)),
        ),
        compiler_params=pltpu.CompilerParams(
            dimension_semantics=("parallel",),
            vmem_limit_bytes=vmem_limit,
        ),
        cost_estimate=cost,
    )(x1f, x2f, w1c, w2c, b1c, b2c, a)

    return out.reshape(N, Cd, H1, W1)


def fusion_block_ref(x1, x2, w1, b1, w2, b2):
    """Pure-JAX f32 reference with the PyTorch op order: conv2 -> interpolate."""
    _, _, H1, W1 = x1.shape
    _, _, H2, W2 = x2.shape
    ah = jnp.asarray(_interp_matrix(H1, H2))
    aw = jnp.asarray(_interp_matrix(W1, W2))
    y1 = jnp.einsum("oi,nihw->nohw", w1, x1) + b1[None, :, None, None]
    y2 = jnp.einsum("oc,nchw->nohw", w2, x2) + b2[None, :, None, None]
    z = jnp.einsum("Hh,nohw,Ww->noHW", ah, y2, aw)
    v = y1 + z
    return jnp.maximum(v, 0.2 * v)


if __name__ == "__main__":
    # Module hyper-params (small, synthetic) -- NCHW like the PyTorch module.
    hidden_dim = 32      # Cd
    small_planes = 8     # Cs
    N, H1, W1 = 2, 16, 16
    H2, W2 = 8, 8

    key = jax.random.PRNGKey(0)
    k1, k2, k3, k4, k5, k6 = jax.random.split(key, 6)

    x1 = jax.random.normal(k1, (N, hidden_dim, H1, W1), dtype=jnp.float32)
    x2 = jax.random.normal(k2, (N, small_planes, H2, W2), dtype=jnp.float32)
    # Conv weights in PyTorch (Cout, Cin) layout (1x1 kernels squeezed).
    w1 = 0.1 * jax.random.normal(k3, (hidden_dim, hidden_dim), dtype=jnp.float32)
    b1 = 0.1 * jax.random.normal(k4, (hidden_dim,), dtype=jnp.float32)
    w2 = 0.1 * jax.random.normal(k5, (hidden_dim, small_planes), dtype=jnp.float32)
    b2 = 0.1 * jax.random.normal(k6, (hidden_dim,), dtype=jnp.float32)

    # Pre-round matmul operands to bf16-representable values so the f32
    # reference and the bf16-operand kernel see identical data; remaining
    # differences come only from bf16 interp coefficients / intermediates.
    rb = lambda a: a.astype(jnp.bfloat16).astype(jnp.float32)
    x1, x2, w1, w2 = rb(x1), rb(x2), rb(w1), rb(w2)

    out = jax.block_until_ready(fusion_block_pallas(x1, x2, w1, b1, w2, b2))
    ref = jax.block_until_ready(fusion_block_ref(x1, x2, w1, b1, w2, b2))

    assert out.shape == (N, hidden_dim, H1, W1)
    np.testing.assert_allclose(np.asarray(out), np.asarray(ref),
                               rtol=1e-2, atol=1e-2)
    print("KERNEL_OK")
</pallas_src>

<mosaic_0001>
module attributes {stable_mosaic.version = 11 : i64} {
  func.func @_fusion_kernel(%arg0: i32, %arg1: memref<1x32x256xbf16, #tpu.memory_space<vmem>>, %arg2: memref<1x8x64xbf16, #tpu.memory_space<vmem>>, %arg3: memref<32x32xbf16, #tpu.memory_space<vmem>>, %arg4: memref<32x8xbf16, #tpu.memory_space<vmem>>, %arg5: memref<32x1xf32, #tpu.memory_space<vmem>>, %arg6: memref<32x1xf32, #tpu.memory_space<vmem>>, %arg7: memref<64x256xbf16, #tpu.memory_space<vmem>>, %arg8: memref<1x32x256xf32, #tpu.memory_space<vmem>>) attributes {dimension_semantics = [#tpu.dimension_semantics<parallel>], iteration_bounds = array<i64: 2>, scalar_prefetch = 0 : i64, scratch_operands = 0 : i64, tpu.core_type = #tpu.core_type<tc>, window_params = [{transform_indices = @transform_0, window_bounds = array<i64: 1, 32, 256>}, {transform_indices = @transform_1, window_bounds = array<i64: 1, 8, 64>}, {pipeline_mode = #tpu.pipeline_mode<synchronous>, transform_indices = @transform_2, window_bounds = array<i64: 32, 32>}, {pipeline_mode = #tpu.pipeline_mode<synchronous>, transform_indices = @transform_3, window_bounds = array<i64: 32, 8>}, {pipeline_mode = #tpu.pipeline_mode<synchronous>, transform_indices = @transform_4, window_bounds = array<i64: 32, 1>}, {pipeline_mode = #tpu.pipeline_mode<synchronous>, transform_indices = @transform_5, window_bounds = array<i64: 32, 1>}, {pipeline_mode = #tpu.pipeline_mode<synchronous>, transform_indices = @transform_6, window_bounds = array<i64: 64, 256>}, {transform_indices = @transform_7, window_bounds = array<i64: 1, 32, 256>}]} {
    %c0 = arith.constant 0 : index
    %c0_0 = arith.constant 0 : index
    %0 = vector.load %arg3[%c0, %c0_0] : memref<32x32xbf16, #tpu.memory_space<vmem>>, vector<32x32xbf16>
    %c0_1 = arith.constant 0 : index
    %c0_2 = arith.constant 0 : index
    %1 = vector.load %arg4[%c0_1, %c0_2] : memref<32x8xbf16, #tpu.memory_space<vmem>>, vector<32x8xbf16>
    %c0_3 = arith.constant 0 : index
    %c0_4 = arith.constant 0 : index
    %2 = vector.load %arg7[%c0_3, %c0_4] : memref<64x256xbf16, #tpu.memory_space<vmem>>, vector<64x256xbf16>
    %c0_5 = arith.constant 0 : index
    %c0_6 = arith.constant 0 : index
    %3 = vector.load %arg5[%c0_5, %c0_6] : memref<32x1xf32, #tpu.memory_space<vmem>>, vector<32x1xf32>
    %c0_7 = arith.constant 0 : index
    %c0_8 = arith.constant 0 : index
    %4 = vector.load %arg6[%c0_7, %c0_8] : memref<32x1xf32, #tpu.memory_space<vmem>>, vector<32x1xf32>
    %c0_9 = arith.constant 0 : index
    %c0_10 = arith.constant 0 : index
    %c0_11 = arith.constant 0 : index
    %5 = vector.load %arg1[%c0_9, %c0_10, %c0_11] : memref<1x32x256xbf16, #tpu.memory_space<vmem>>, vector<1x32x256xbf16>
    %6 = vector.shape_cast %5 : vector<1x32x256xbf16> to vector<32x256xbf16>
    %cst = arith.constant dense<0.000000e+00> : vector<32x256xf32>
    %7 = tpu.matmul %0, %6, %cst {dimension_numbers = #tpu.dot_dimension_numbers<[1], [0], [0], [1], [0, 0, 1, 1], [], []>} : vector<32x32xbf16>, vector<32x256xbf16>, vector<32x256xf32> -> vector<32x256xf32>
    %8 = vector.broadcast %3 : vector<32x1xf32> to vector<32x256xf32>
    %9 = arith.addf %7, %8 : vector<32x256xf32>
    %c0_12 = arith.constant 0 : index
    %c0_13 = arith.constant 0 : index
    %c0_14 = arith.constant 0 : index
    %10 = vector.load %arg2[%c0_12, %c0_13, %c0_14] : memref<1x8x64xbf16, #tpu.memory_space<vmem>>, vector<1x8x64xbf16>
    %11 = vector.shape_cast %10 : vector<1x8x64xbf16> to vector<8x64xbf16>
    %cst_15 = arith.constant dense<0.000000e+00> : vector<32x64xf32>
    %12 = tpu.matmul %1, %11, %cst_15 {dimension_numbers = #tpu.dot_dimension_numbers<[1], [0], [0], [1], [0, 0, 1, 1], [], []>} : vector<32x8xbf16>, vector<8x64xbf16>, vector<32x64xf32> -> vector<32x64xf32>
    %13 = vector.broadcast %4 : vector<32x1xf32> to vector<32x64xf32>
    %14 = arith.addf %12, %13 : vector<32x64xf32>
    %15 = arith.truncf %14 : vector<32x64xf32> to vector<32x64xbf16>
    %cst_16 = arith.constant dense<0.000000e+00> : vector<32x256xf32>
    %16 = tpu.matmul %15, %2, %cst_16 {dimension_numbers = #tpu.dot_dimension_numbers<[1], [0], [0], [1], [0, 0, 1, 1], [], []>} : vector<32x64xbf16>, vector<64x256xbf16>, vector<32x256xf32> -> vector<32x256xf32>
    %17 = arith.addf %9, %16 : vector<32x256xf32>
    %cst_17 = arith.constant 2.000000e-01 : f32
    %18 = vector.broadcast %cst_17 : f32 to vector<32x256xf32>
    %19 = arith.mulf %18, %17 : vector<32x256xf32>
    %20 = arith.maximumf %17, %19 : vector<32x256xf32>
    %c0_18 = arith.constant 0 : index
    %c0_19 = arith.constant 0 : index
    %c0_20 = arith.constant 0 : index
    %21 = vector.load %arg8[%c0_18, %c0_19, %c0_20] : memref<1x32x256xf32, #tpu.memory_space<vmem>>, vector<1x32x256xf32>
    %22 = vector.shape_cast %21 : vector<1x32x256xf32> to vector<32x256xf32>
    %23 = vector.shape_cast %20 : vector<32x256xf32> to vector<1x32x256xf32>
    tpu.vector_store %arg8[%c0_18, %c0_19, %c0_20], %23 {strides = array<i32>} : memref<1x32x256xf32, #tpu.memory_space<vmem>>, vector<1x32x256xf32>,
    return
  }
  func.func @transform_0(%arg0: i32) -> (i32, i32, i32) {
    %c0_i32 = arith.constant 0 : i32
    %c0_i32_0 = arith.constant 0 : i32
    %c0_i32_1 = arith.constant 0 : i32
    return %arg0, %c0_i32, %c0_i32_0 : i32, i32, i32
  }
  func.func @transform_1(%arg0: i32) -> (i32, i32, i32) {
    %c0_i32 = arith.constant 0 : i32
    %c0_i32_0 = arith.constant 0 : i32
    %c0_i32_1 = arith.constant 0 : i32
    return %arg0, %c0_i32, %c0_i32_0 : i32, i32, i32
  }
  func.func @transform_2(%arg0: i32) -> (i32, i32) {
    %c0_i32 = arith.constant 0 : i32
    %c0_i32_0 = arith.constant 0 : i32
    %c0_i32_1 = arith.constant 0 : i32
    return %c0_i32, %c0_i32_0 : i32, i32
  }
  func.func @transform_3(%arg0: i32) -> (i32, i32) {
    %c0_i32 = arith.constant 0 : i32
    %c0_i32_0 = arith.constant 0 : i32
    %c0_i32_1 = arith.constant 0 : i32
    return %c0_i32, %c0_i32_0 : i32, i32
  }
  func.func @transform_4(%arg0: i32) -> (i32, i32) {
    %c0_i32 = arith.constant 0 : i32
    %c0_i32_0 = arith.constant 0 : i32
    %c0_i32_1 = arith.constant 0 : i32
    return %c0_i32, %c0_i32_0 : i32, i32
  }
  func.func @transform_5(%arg0: i32) -> (i32, i32) {
    %c0_i32 = arith.constant 0 : i32
    %c0_i32_0 = arith.constant 0 : i32
    %c0_i32_1 = arith.constant 0 : i32
    return %c0_i32, %c0_i32_0 : i32, i32
  }
  func.func @transform_6(%arg0: i32) -> (i32, i32) {
    %c0_i32 = arith.constant 0 : i32
    %c0_i32_0 = arith.constant 0 : i32
    %c0_i32_1 = arith.constant 0 : i32
    return %c0_i32, %c0_i32_0 : i32, i32
  }
  func.func @transform_7(%arg0: i32) -> (i32, i32, i32) {
    %c0_i32 = arith.constant 0 : i32
    %c0_i32_0 = arith.constant 0 : i32
    %c0_i32_1 = arith.constant 0 : i32
    return %arg0, %c0_i32, %c0_i32_0 : i32, i32, i32
  }
}

</mosaic_0001>

<llo_original>
// kernel: tpu_custom_call.1
$region0: #{tpu_custom_call.1}
  #allocation0 [shape = 'u32[]', space=smem, size = 0x4, offset = 0x4, fixed_abs, tag = 'smem constant byte address 0x4 - core index']
  #allocation1 [shape = 'u32[144,128]{1,0:T(1,128)}', space=vmem, size = 0x12000, scoped, tag = 'internal scratch']
  %s0 = inlined_call_operand.vmem [shape: bf16[2,32,256], index: 0, kind: input, shape index: {}]
  %s1 = inlined_call_operand.vmem [shape: bf16[2,8,64], index: 1, kind: input, shape index: {}]
  %s2 = inlined_call_operand.vmem [shape: bf16[32,32], index: 2, kind: input, shape index: {}]
  %s3 = inlined_call_operand.vmem [shape: bf16[32,8], index: 3, kind: input, shape index: {}]
  %s4 = inlined_call_operand.vmem [shape: f32[32,1], index: 4, kind: input, shape index: {}]
  %s5 = inlined_call_operand.vmem [shape: f32[32,1], index: 5, kind: input, shape index: {}]
  %s6 = inlined_call_operand.hbm [shape: bf16[64,256], index: 6, kind: input, shape index: {}]
  %s7 = inlined_call_operand.hbm [shape: f32[2,32,256], index: 7, kind: output, shape index: {}]
  %s8 = sld [smem:[#allocation0]]
  $region65: #{tpu_custom_call.1} parent=0
    _
  %s10 = ssub.s32 1, %s8
  %s11 = scalar_select 0, %s10, %s8
  $region1: #{tpu_custom_call.1} parent=0
    #allocation2 [shape = 'u8[32768]{0}', space=vmem, size = 0x8000, scoped, tag = 'input window, operand 6, single buffered']
    #allocation3 [shape = 's32[2]{0}', space=sflag, size = 0x8, scoped, tag = 'scoped memory for tpu_custom_call.1']
    #allocation4 [shape = 's32[2]{0}', space=sflag, size = 0x8, scoped, tag = 'scoped memory for tpu_custom_call.1']
    #allocation5 [shape = 'u8[65536]{0}', space=vmem, size = 0x10000, scoped, tag = 'output window, operand 0']
    %12 = vsyncpa [#allocation3], 0
    %13 = vsyncpa [#allocation4], 0
    %s14 = scalar_lea.sflag [#allocation4], 1
    %15 = vsyncpa %s14, 0
    loop: start=0, step=1, limit=4
    $region2: #{tpu_custom_call.1} parent=1 // loop_pre_header
      _
    $region3: #{tpu_custom_call.1} parent=1 // loop_header
      %s17 = sphi 0, %s21
      %p18 = scmp.ge.s32.totalorder %s17, 4
      %s27 = sphi 0, %s29
      %s30 = sphi 0, %s27
      %s31 = sphi 0, %s30
      %s47 = sphi 0, %s31
      %s53 = sphi 0, %s55
      %s56 = sphi 0, %s53
      %s57 = sphi 0, %s56
      %s73 = sphi 0, %s57
      %s77 = sphi 0, %s77
      %s79 = sphi 0, %s77
      %s80 = sphi 0, %s79
      %s94 = sphi 0, %s80
      %s98 = sphi 0, %s98
      %s100 = sphi 0, %s98
      %s101 = sphi 0, %s100
      %s115 = sphi 0, %s101
      %s119 = sphi 0, %s119
      %s121 = sphi 0, %s119
      %s122 = sphi 0, %s121
      %s136 = sphi 0, %s122
      %s140 = sphi 0, %s140
      %s142 = sphi 0, %s140
      %s143 = sphi 0, %s142
      %s157 = sphi 0, %s143
      %s161 = sphi 0, %s161
      %s163 = sphi 0, %s161
      %s164 = sphi 0, %s163
      %s178 = sphi 0, %s164
      %s184 = sphi 0, %s186
      %s187 = sphi 0, %s184
      %s188 = sphi 0, %s187
      %s204 = sphi 0, %s188
    $region4: #{tpu_custom_call.1} parent=1 // loop_header_branch
      %20 = sbr.rel (%p18) target = $region8
    $region5: #{tpu_custom_call.1} parent=1 // loop_body
      %s22 = ssub.s32 %s17, 1
      %s23 = ssub.s32 %s17, 2
      %s24 = sadd.s32 %s17, 1
      %s25 = ssub.s32 %s17, %s24
      %p26 = scmp.eq.s32.totalorder %s25, 0
      %s28 = sadd.s32 %s27, 1
      %s29 = scalar_select %p26, %s27, %s28
      %p32 = pneg %p26
      %p33 = scmp.eq.s32.totalorder %s17, 1
      %p34 = por %p32, %p33
      %p35 = scmp.ne.s32.totalorder %s27, %s30
      %p36 = scmp.eq.s32.totalorder %s17, 0
      %p37 = por %p35, %p36
      %p38 = scmp.ne.s32.totalorder %s27, %s30
      %p39 = scmp.eq.s32.totalorder %s22, 1
      %p40 = por %p38, %p39
      %p41 = scmp.ne.s32.totalorder %s30, %s31
      %p42 = scmp.eq.s32.totalorder %s22, 0
      %p43 = por %p41, %p42
      %p44 = scmp.ne.s32.totalorder %s30, %s31
      %p45 = scmp.eq.s32.totalorder %s23, 1
      %p46 = por %p44, %p45
      %p48 = scmp.ne.s32.totalorder %s31, %s47
      %p49 = scmp.eq.s32.totalorder %s23, 0
      %p50 = por %p48, %p49
      %s51 = ssub.s32 %s17, %s24
      %p52 = scmp.eq.s32.totalorder %s51, 0
      %s54 = sadd.s32 %s53, 1
      %s55 = scalar_select %p52, %s53, %s54
      %p58 = pneg %p52
      %p59 = scmp.eq.s32.totalorder %s17, 1
      %p60 = por %p58, %p59
      %p61 = scmp.ne.s32.totalorder %s53, %s56
      %p62 = scmp.eq.s32.totalorder %s17, 0
      %p63 = por %p61, %p62
      %p64 = scmp.ne.s32.totalorder %s53, %s56
      %p65 = scmp.eq.s32.totalorder %s22, 1
      %p66 = por %p64, %p65
      %p67 = scmp.ne.s32.totalorder %s56, %s57
      %p68 = scmp.eq.s32.totalorder %s22, 0
      %p69 = por %p67, %p68
      %p70 = scmp.ne.s32.totalorder %s56, %s57
      %p71 = scmp.eq.s32.totalorder %s23, 1
      %p72 = por %p70, %p71
      %p74 = scmp.ne.s32.totalorder %s57, %s73
      %p75 = scmp.eq.s32.totalorder %s23, 0
      %p76 = por %p74, %p75
      %s78 = sadd.s32 %s77, 1
      %p81 = scmp.eq.s32.totalorder %s17, 1
      %p82 = scmp.ne.s32.totalorder %s77, %s79
      %p83 = scmp.eq.s32.totalorder %s17, 0
      %p84 = por %p82, %p83
      %p85 = scmp.ne.s32.totalorder %s77, %s79
      %p86 = scmp.eq.s32.totalorder %s22, 1
      %p87 = por %p85, %p86
      %p88 = scmp.ne.s32.totalorder %s79, %s80
      %p89 = scmp.eq.s32.totalorder %s22, 0
      %p90 = por %p88, %p89
      %p91 = scmp.ne.s32.totalorder %s79, %s80
      %p92 = scmp.eq.s32.totalorder %s23, 1
      %p93 = por %p91, %p92
      %p95 = scmp.ne.s32.totalorder %s80, %s94
      %p96 = scmp.eq.s32.totalorder %s23, 0
      %p97 = por %p95, %p96
      %s99 = sadd.s32 %s98, 1
      %p102 = scmp.eq.s32.totalorder %s17, 1
      %p103 = scmp.ne.s32.totalorder %s98, %s100
      %p104 = scmp.eq.s32.totalorder %s17, 0
      %p105 = por %p103, %p104
      %p106 = scmp.ne.s32.totalorder %s98, %s100
      %p107 = scmp.eq.s32.totalorder %s22, 1
      %p108 = por %p106, %p107
      %p109 = scmp.ne.s32.totalorder %s100, %s101
      %p110 = scmp.eq.s32.totalorder %s22, 0
      %p111 = por %p109, %p110
      %p112 = scmp.ne.s32.totalorder %s100, %s101
      %p113 = scmp.eq.s32.totalorder %s23, 1
      %p114 = por %p112, %p113
      %p116 = scmp.ne.s32.totalorder %s101, %s115
      %p117 = scmp.eq.s32.totalorder %s23, 0
      %p118 = por %p116, %p117
      %s120 = sadd.s32 %s119, 1
      %p123 = scmp.eq.s32.totalorder %s17, 1
      %p124 = scmp.ne.s32.totalorder %s119, %s121
      %p125 = scmp.eq.s32.totalorder %s17, 0
      %p126 = por %p124, %p125
      %p127 = scmp.ne.s32.totalorder %s119, %s121
      %p128 = scmp.eq.s32.totalorder %s22, 1
      %p129 = por %p127, %p128
      %p130 = scmp.ne.s32.totalorder %s121, %s122
      %p131 = scmp.eq.s32.totalorder %s22, 0
      %p132 = por %p130, %p131
      %p133 = scmp.ne.s32.totalorder %s121, %s122
      %p134 = scmp.eq.s32.totalorder %s23, 1
      %p135 = por %p133, %p134
      %p137 = scmp.ne.s32.totalorder %s122, %s136
      %p138 = scmp.eq.s32.totalorder %s23, 0
      %p139 = por %p137, %p138
      %s141 = sadd.s32 %s140, 1
      %p144 = scmp.eq.s32.totalorder %s17, 1
      %p145 = scmp.ne.s32.totalorder %s140, %s142
      %p146 = scmp.eq.s32.totalorder %s17, 0
      %p147 = por %p145, %p146
      %p148 = scmp.ne.s32.totalorder %s140, %s142
      %p149 = scmp.eq.s32.totalorder %s22, 1
      %p150 = por %p148, %p149
      %p151 = scmp.ne.s32.totalorder %s142, %s143
      %p152 = scmp.eq.s32.totalorder %s22, 0
      %p153 = por %p151, %p152
      %p154 = scmp.ne.s32.totalorder %s142, %s143
      %p155 = scmp.eq.s32.totalorder %s23, 1
      %p156 = por %p154, %p155
      %p158 = scmp.ne.s32.totalorder %s143, %s157
      %p159 = scmp.eq.s32.totalorder %s23, 0
      %p160 = por %p158, %p159
      %s162 = sadd.s32 %s161, 1
      %p165 = scmp.eq.s32.totalorder %s17, 1
      %p166 = scmp.ne.s32.totalorder %s161, %s163
      %p167 = scmp.eq.s32.totalorder %s17, 0
      %p168 = por %p166, %p167
      %p169 = scmp.ne.s32.totalorder %s161, %s163
      %p170 = scmp.eq.s32.totalorder %s22, 1
      %p171 = por %p169, %p170
      %p172 = scmp.ne.s32.totalorder %s163, %s164
      %p173 = scmp.eq.s32.totalorder %s22, 0
      %p174 = por %p172, %p173
      %p175 = scmp.ne.s32.totalorder %s163, %s164
      %p176 = scmp.eq.s32.totalorder %s23, 1
      %p177 = por %p175, %p176
      %p179 = scmp.ne.s32.totalorder %s164, %s178
      %p180 = scmp.eq.s32.totalorder %s23, 0
      %p181 = por %p179, %p180
      %s182 = ssub.s32 %s17, %s24
      %p183 = scmp.eq.s32.totalorder %s182, 0
      %s185 = sadd.s32 %s184, 1
      %s186 = scalar_select %p183, %s184, %s185
      %p189 = pneg %p183
      %p190 = scmp.eq.s32.totalorder %s17, 1
      %p191 = por %p189, %p190
      %p192 = scmp.ne.s32.totalorder %s184, %s187
      %p193 = scmp.eq.s32.totalorder %s17, 0
      %p194 = por %p192, %p193
      %p195 = scmp.ne.s32.totalorder %s184, %s187
      %p196 = scmp.eq.s32.totalorder %s22, 1
      %p197 = por %p195, %p196
      %p198 = scmp.ne.s32.totalorder %s187, %s188
      %p199 = scmp.eq.s32.totalorder %s22, 0
      %p200 = por %p198, %p199
      %p201 = scmp.ne.s32.totalorder %s187, %s188
      %p202 = scmp.eq.s32.totalorder %s23, 1
      %p203 = por %p201, %p202
      %p205 = scmp.ne.s32.totalorder %s188, %s204
      %p206 = scmp.eq.s32.totalorder %s23, 0
      %p207 = por %p205, %p206
      %p208 = scmp.le.s32.totalorder 1, %s17
      %p209 = scmp.lt.s32.totalorder %s17, 3
      %p210 = pnand %p208, %p209
      %p211 = pneg %p210
      // Predicated region
      $region9: #{tpu_custom_call.1} parent=5 // pred_check
        _
      $region10: #{tpu_custom_call.1} parent=5 // pred_check_branch
        %213 = sbr.rel (%p210) target = $region12
      $region11: #{tpu_custom_call.1} parent=5 // pred_region
        %s214 = ssub.s32 %s17, 1
        // Predicated region
        $region13: #{tpu_custom_call.1} parent=11 // pred_check
          %p215 = pneg %p90
        $region14: #{tpu_custom_call.1} parent=11 // pred_check_branch
          %217 = sbr.rel (%p215) target = $region16
        $region15: #{tpu_custom_call.1} parent=11 // pred_region
          _
        $region16: #{tpu_custom_call.1} parent=11 // pred_fallthru
          _
        // Predicated region
        $region17: #{tpu_custom_call.1} parent=11 // pred_check
          %p218 = pneg %p111
        $region18: #{tpu_custom_call.1} parent=11 // pred_check_branch
          %220 = sbr.rel (%p218) target = $region20
        $region19: #{tpu_custom_call.1} parent=11 // pred_region
          _
        $region20: #{tpu_custom_call.1} parent=11 // pred_fallthru
          _
        // Predicated region
        $region21: #{tpu_custom_call.1} parent=11 // pred_check
          %p221 = pneg %p132
        $region22: #{tpu_custom_call.1} parent=11 // pred_check_branch
          %223 = sbr.rel (%p221) target = $region24
        $region23: #{tpu_custom_call.1} parent=11 // pred_region
          _
        $region24: #{tpu_custom_call.1} parent=11 // pred_fallthru
          _
        // Predicated region
        $region25: #{tpu_custom_call.1} parent=11 // pred_check
          %p224 = pneg %p153
        $region26: #{tpu_custom_call.1} parent=11 // pred_check_branch
          %226 = sbr.rel (%p224) target = $region28
        $region27: #{tpu_custom_call.1} parent=11 // pred_region
          _
        $region28: #{tpu_custom_call.1} parent=11 // pred_fallthru
          _
        // Predicated region
        $region29: #{tpu_custom_call.1} parent=11 // pred_check
          %p227 = pneg %p174
        $region30: #{tpu_custom_call.1} parent=11 // pred_check_branch
          %229 = sbr.rel (%p227) target = $region32
        $region31: #{tpu_custom_call.1} parent=11 // pred_region
          %s231 = ssub.s32 1024, 1024
          %232 = vsyncadd [#allocation3], %s231
          %s233 = sshll.u32 [#allocation2], 4
          %s234 = int_to_ptr.vmem [resolvable:$true] %s233
          %239 = dma.hbm_to_vmem [thread:$0]  %s6, 1024, %s234, [#allocation3], 128, 128, 8
        $region32: #{tpu_custom_call.1} parent=11 // pred_fallthru
          _
      $region12: #{tpu_custom_call.1} parent=5 // pred_fallthru
        _
      %p240 = scmp.lt.s32.totalorder %s17, 2
      // Predicated region
      $region33: #{tpu_custom_call.1} parent=5 // pred_check
        %p241 = pneg %p240
      $region34: #{tpu_custom_call.1} parent=5 // pred_check_branch
        %243 = sbr.rel (%p241) target = $region36
      $region35: #{tpu_custom_call.1} parent=5 // pred_region
        // Predicated region
        $region37: #{tpu_custom_call.1} parent=35 // pred_check
          %p244 = pneg %p37
        $region38: #{tpu_custom_call.1} parent=35 // pred_check_branch
          %246 = sbr.rel (%p244) target = $region40
        $region39: #{tpu_custom_call.1} parent=35 // pred_region
          %p247 = scmp.lt.s32.totalorder %s17, 1
          %s248 = scalar_select %p247, %s17, 1
          %s249 = smul.addr %s248, 8
          %s250 = smul.addr %s249, 4
          %s251 = scalar_lea.vmem %s0, %s250
        $region40: #{tpu_custom_call.1} parent=35 // pred_fallthru
          _
        // Predicated region
        $region41: #{tpu_custom_call.1} parent=35 // pred_check
          %p252 = pneg %p63
        $region42: #{tpu_custom_call.1} parent=35 // pred_check_branch
          %254 = sbr.rel (%p252) target = $region44
        $region43: #{tpu_custom_call.1} parent=35 // pred_region
          %p255 = scmp.lt.s32.totalorder %s17, 1
          %s256 = scalar_select %p255, %s17, 1
          %s257 = smul.addr %s256, 4
          %s258 = scalar_lea.vmem %s1, %s257
        $region44: #{tpu_custom_call.1} parent=35 // pred_fallthru
          _
      $region36: #{tpu_custom_call.1} parent=5 // pred_fallthru
        _
      %p259 = scmp.le.s32.totalorder 1, %s17
      %p260 = scmp.lt.s32.totalorder %s17, 3
      %p261 = pnand %p259, %p260
      %p262 = pneg %p261
      // Predicated region
      $region45: #{tpu_custom_call.1} parent=5 // pred_check
        _
      $region46: #{tpu_custom_call.1} parent=5 // pred_check_branch
        %264 = sbr.rel (%p261) target = $region48
      $region47: #{tpu_custom_call.1} parent=5 // pred_region
        %s265 = ssub.s32 %s17, 1
        // Predicated region
        $region49: #{tpu_custom_call.1} parent=47 // pred_check
          %p266 = pneg %p174
        $region50: #{tpu_custom_call.1} parent=47 // pred_check_branch
          %268 = sbr.rel (%p266) target = $region52
        $region51: #{tpu_custom_call.1} parent=47 // pred_region
          %269 = dma.done [#allocation3], 1024
        $region52: #{tpu_custom_call.1} parent=47 // pred_fallthru
          _
        %p270 = scmp.lt.s32.totalorder %s22, 1
        %s271 = scalar_select %p270, %s22, 1
        %s272 = smul.addr %s271, 8
        %s273 = smul.addr %s272, 4
        %s274 = scalar_lea.vmem %s0, %s273
        %p275 = pneg %p43
        %p276 = pneg %p40
        %p277 = scmp.lt.s32.totalorder %s22, 1
        %s278 = scalar_select %p277, %s22, 1
        %s279 = smul.addr %s278, 4
        %s280 = scalar_lea.vmem %s1, %s279
        %p281 = pneg %p69
        %p282 = pneg %p66
        %p283 = pneg %p90
        %p284 = pneg %p87
        %p285 = pneg %p111
        %p286 = pneg %p108
        %p287 = pneg %p132
        %p288 = pneg %p129
        %p289 = pneg %p153
        %p290 = pneg %p150
        %p291 = pneg %p174
        %p292 = pneg %p171
        %p293 = pneg %p200
        %p294 = pneg %p197
        %s295 = sand.u32 %s187, 1
        %s296 = scalar_lea.sflag [#allocation4], %s295
        %s297 = sand.u32 %s187, 1
        %s298 = smul.addr %s297, 64
        %s299 = scalar_lea.vmem [#allocation5], %s298
        %p300 = scmp.lt.s32.totalorder %s22, 1
        %s301 = scalar_select %p300, %s22, 1
        %s302 = smul.addr %s301, 8
        %s303 = smul.addr %s302, 4
        %s304 = scalar_lea.vmem %s0, %s303
        %p305 = scmp.lt.s32.totalorder %s22, 1
        %s306 = scalar_select %p305, %s22, 1
        %s307 = smul.addr %s306, 4
        %s308 = scalar_lea.vmem %s1, %s307
        %v310 = vld [vmem:[%s2] sm:$0xf]
        %v311 = vld [vmem:[%s2 + $0x4] sm:$0xf]
        %v312 = vld [vmem:[%s2 + $0x8] sm:$0xf]
        %v313 = vld [vmem:[%s2 + $0xc] sm:$0xf]
        %v314 = vld [vmem:[%s3] sm:$0xf]
        %v315 = vld [vmem:[%s3 + $0x4] sm:$0xf]
        %v316 = vld [vmem:[%s3 + $0x8] sm:$0xf]
        %v317 = vld [vmem:[%s3 + $0xc] sm:$0xf]
        %v318 = vld [vmem:[#allocation2] sm:$0xff]
        %v319 = vld [vmem:[#allocation2 + $0x8] sm:$0xff]
        %v320 = vld [vmem:[#allocation2 + $0x10] sm:$0xff]
        %v321 = vld [vmem:[#allocation2 + $0x18] sm:$0xff]
        %v322 = vld [vmem:[#allocation2 + $0x20] sm:$0xff]
        %v323 = vld [vmem:[#allocation2 + $0x28] sm:$0xff]
        %v324 = vld [vmem:[#allocation2 + $0x30] sm:$0xff]
        %v325 = vld [vmem:[#allocation2 + $0x38] sm:$0xff]
        %v326 = vld [vmem:[%s4] sm:$0xff]
        %v327 = vld [vmem:[%s4 + $0x8] sm:$0xff]
        %v328 = vld [vmem:[%s4 + $0x10] sm:$0xff]
        %v329 = vld [vmem:[%s4 + $0x18] sm:$0xff]
        %v330 = vld [vmem:[%s5] sm:$0xff]
        %v331 = vld [vmem:[%s5 + $0x8] sm:$0xff]
        %v332 = vld [vmem:[%s5 + $0x10] sm:$0xff]
        %v333 = vld [vmem:[%s5 + $0x18] sm:$0xff]
        %v334 = vld [vmem:[%s304] sm:$0xff]
        %v335 = vld [vmem:[%s304 + $0x8] sm:$0xff]
        %v336 = vld [vmem:[%s304 + $0x10] sm:$0xff]
        %v337 = vld [vmem:[%s304 + $0x18] sm:$0xff]
        %339 = vset.pattern.permute.xlu0 0
        %340 = vperm.xlu0 %339, %v326
        %v341 = vpop.permute.xlu0 %340
        %344 = vset.pattern.permute.xlu0 0
        %345 = vperm.xlu0 %344, %v327
        %v346 = vpop.permute.xlu0 %345
        %349 = vset.pattern.permute.xlu0 0
        %350 = vperm.xlu0 %349, %v328
        %v351 = vpop.permute.xlu0 %350
        %354 = vset.pattern.permute.xlu0 0
        %355 = vperm.xlu0 %354, %v329
        %v356 = vpop.permute.xlu0 %355
        %v362 = vunpack.c.l.b16 %v310
        %v363 = vunpack.c.l.b16 %v311
        %v364 = vunpack.c.l.b16 %v312
        %v365 = vunpack.c.l.b16 %v313
        %v366 = vpack.c.b16 %v363, %v362
        %v367 = vpack.c.b16 %v365, %v364
        %v372 = vunpack.c.l.b16 %v334
        %v373 = vunpack.c.h.b16 %v334
        %v374 = vunpack.c.l.b16 %v335
        %v375 = vunpack.c.h.b16 %v335
        %v376 = vunpack.c.l.b16 %v336
        %v377 = vunpack.c.h.b16 %v336
        %v378 = vunpack.c.l.b16 %v337
        %v379 = vunpack.c.h.b16 %v337
        %v380 = vpack.c.b16 %v374, %v372
        %v381 = vpack.c.b16 %v375, %v373
        %v382 = vpack.c.b16 %v378, %v376
        %v383 = vpack.c.b16 %v379, %v377
        %vm388 = vcmask 261120
        %v390 = vsel %vm388, %v366, 0
        %v393 = vsel %vm388, %v367, 0
        %395 = vmatprep.subr.bf16.mxu0 %v381
        %396 = vmatpush1.bf16.msra.mxu0 %v380
        %397 = vmatprep.subr.bf16.mxu0 %v383
        %398 = vmatpush1.bf16.msra.mxu0 %v382
        %399 = vmatprep.subr.bf16.mxu0 0
        %400 = vmatpush1.bf16.msra.mxu0 0
        %401 = vmatprep.subr.bf16.mxu0 0
        %402 = vmatpush1.bf16.msra.mxu0 0
        %403 = vmatprep.subr.bf16.mxu0 0
        %404 = vmatpush1.bf16.msra.mxu0 0
        %405 = vmatprep.subr.bf16.mxu0 0
        %406 = vmatpush1.bf16.msra.mxu0 0
        %407 = vmatprep.subr.bf16.mxu0 0
        %408 = vmatpush1.bf16.msra.mxu0 0
        %409 = vmatprep.subr.bf16.mxu0 0
        %410 = vmatpush1.bf16.msra.mxu0 0
        %411 = vmatprep.subr.bf16.mxu0 0
        %412 = vmatpush1.bf16.msra.mxu0 0
        %413 = vmatprep.subr.bf16.mxu0 0
        %414 = vmatpush1.bf16.msra.mxu0 0
        %415 = vmatprep.subr.bf16.mxu0 0
        %416 = vmatpush1.bf16.msra.mxu0 0
        %417 = vmatprep.subr.bf16.mxu0 0
        %418 = vmatpush1.bf16.msra.mxu0 0
        %419 = vmatprep.subr.bf16.mxu0 0
        %420 = vmatpush1.bf16.msra.mxu0 0
        %421 = vmatprep.subr.bf16.mxu0 0
        %422 = vmatpush1.bf16.msra.mxu0 0
        %423 = vmatprep.subr.bf16.mxu0 0
        %424 = vmatpush1.bf16.msra.mxu0 0
        %425 = vmatprep.subr.bf16.mxu0 0
        %426 = vmatpush1.bf16.msra.mxu0 0
        %427 = vmatprep.mubr.bf16.mxu0 0
        %428 = vmatmul.mubr.bf16.gmra.mrb[0].mxu0 %v390
        %v429 = vpop.f32.mrb[0].mxu0
        %v430 = vadd.f32 %v341, %v429
        %v431 = vpop.f32.mrb[0].mxu0
        %v432 = vadd.f32 %v341, %v431
        %v433 = vpop.f32.mrb[0].mxu0
        %v434 = vadd.f32 %v346, %v433
        %v435 = vpop.f32.mrb[0].mxu0
        %v436 = vadd.f32 %v346, %v435
        %437 = vmatprep.mubr.bf16.mxu0 0
        %438 = vmatmul.mubr.bf16.gmra.mrb[0].mxu0 %v393
        %v439 = vpop.f32.mrb[0].mxu0
        %v440 = vadd.f32 %v351, %v439
        %v441 = vpop.f32.mrb[0].mxu0
        %v442 = vadd.f32 %v351, %v441
        %v443 = vpop.f32.mrb[0].mxu0
        %v444 = vadd.f32 %v356, %v443
        %v445 = vpop.f32.mrb[0].mxu0
        %v446 = vadd.f32 %v356, %v445
        %447 = vdwg.mxu0
        %v448 = vld [vmem:[%s308] sm:$0xf]
        %450 = vset.pattern.permute.xlu0 0
        %451 = vperm.xlu0 %450, %v330
        %v452 = vpop.permute.xlu0 %451
        %455 = vset.pattern.permute.xlu0 0
        %456 = vperm.xlu0 %455, %v331
        %v457 = vpop.permute.xlu0 %456
        %460 = vset.pattern.permute.xlu0 0
        %461 = vperm.xlu0 %460, %v332
        %v462 = vpop.permute.xlu0 %461
        %465 = vset.pattern.permute.xlu0 0
        %466 = vperm.xlu0 %465, %v333
        %v467 = vpop.permute.xlu0 %466
        %v473 = vunpack.c.l.b16 %v314
        %v474 = vunpack.c.l.b16 %v315
        %v475 = vunpack.c.l.b16 %v316
        %v476 = vunpack.c.l.b16 %v317
        %v477 = vpack.c.b16 %v474, %v473
        %v478 = vpack.c.b16 %v476, %v475
        %vm479 = vcmask 64512
        %v481 = vsel %vm479, %v477, 0
        %v484 = vsel %vm479, %v478, 0
        %vm486 = vcmask 1043456
        %v488 = vsel %vm486, %v448, 0
        %490 = vmatprep.subr.bf16.mxu0 0
        %491 = vmatpush1.bf16.msra.mxu0 %v488
        %492 = vmatprep.subr.bf16.mxu0 0
        %493 = vmatpush1.bf16.msra.mxu0 0
        %494 = vmatprep.subr.bf16.mxu0 0
        %495 = vmatpush1.bf16.msra.mxu0 0
        %496 = vmatprep.subr.bf16.mxu0 0
        %497 = vmatpush1.bf16.msra.mxu0 0
        %498 = vmatprep.subr.bf16.mxu0 0
        %499 = vmatpush1.bf16.msra.mxu0 0
        %500 = vmatprep.subr.bf16.mxu0 0
        %501 = vmatpush1.bf16.msra.mxu0 0
        %502 = vmatprep.subr.bf16.mxu0 0
        %503 = vmatpush1.bf16.msra.mxu0 0
        %504 = vmatprep.subr.bf16.mxu0 0
        %505 = vmatpush1.bf16.msra.mxu0 0
        %506 = vmatprep.subr.bf16.mxu0 0
        %507 = vmatpush1.bf16.msra.mxu0 0
        %508 = vmatprep.subr.bf16.mxu0 0
        %509 = vmatpush1.bf16.msra.mxu0 0
        %510 = vmatprep.subr.bf16.mxu0 0
        %511 = vmatpush1.bf16.msra.mxu0 0
        %512 = vmatprep.subr.bf16.mxu0 0
        %513 = vmatpush1.bf16.msra.mxu0 0
        %514 = vmatprep.subr.bf16.mxu0 0
        %515 = vmatpush1.bf16.msra.mxu0 0
        %516 = vmatprep.subr.bf16.mxu0 0
        %517 = vmatpush1.bf16.msra.mxu0 0
        %518 = vmatprep.subr.bf16.mxu0 0
        %519 = vmatpush1.bf16.msra.mxu0 0
        %520 = vmatprep.subr.bf16.mxu0 0
        %521 = vmatpush1.bf16.msra.mxu0 0
        %522 = vmatprep.mubr.bf16.mxu0 0
        %523 = vmatmul.mubr.bf16.gmra.mrb[0].mxu0 %v481
        %v524 = vpop.f32.mrb[0].mxu0
        %v525 = vadd.f32 %v452, %v524
        %v526 = vpop.f32.mrb[0].mxu0
        %v527 = vpop.f32.mrb[0].mxu0
        %v528 = vadd.f32 %v457, %v527
        %v529 = vpop.f32.mrb[0].mxu0
        %530 = vmatprep.mubr.bf16.mxu0 0
        %531 = vmatmul.mubr.bf16.gmra.mrb[0].mxu0 %v484
        %v532 = vpop.f32.mrb[0].mxu0
        %v533 = vadd.f32 %v462, %v532
        %v534 = vpop.f32.mrb[0].mxu0
        %v535 = vpop.f32.mrb[0].mxu0
        %v536 = vadd.f32 %v467, %v535
        %v537 = vpop.f32.mrb[0].mxu0
        %538 = vdwg.mxu0
        %v539 = vpack.c.bf16 %v528, %v525
        %v540 = vpack.c.bf16 %v536, %v533
        %v549 = vunpack.c.l.b16 %v318
        %v550 = vunpack.c.h.b16 %v318
        %v551 = vunpack.c.l.b16 %v319
        %v552 = vunpack.c.h.b16 %v319
        %v553 = vunpack.c.l.b16 %v320
        %v554 = vunpack.c.h.b16 %v320
        %v555 = vunpack.c.l.b16 %v321
        %v556 = vunpack.c.h.b16 %v321
        %v557 = vunpack.c.l.b16 %v322
        %v558 = vunpack.c.h.b16 %v322
        %v559 = vunpack.c.l.b16 %v323
        %v560 = vunpack.c.h.b16 %v323
        %v561 = vunpack.c.l.b16 %v324
        %v562 = vunpack.c.h.b16 %v324
        %v563 = vunpack.c.l.b16 %v325
        %v564 = vunpack.c.h.b16 %v325
        %v565 = vpack.c.b16 %v551, %v549
        %v566 = vpack.c.b16 %v552, %v550
        %v567 = vpack.c.b16 %v555, %v553
        %v568 = vpack.c.b16 %v556, %v554
        %v569 = vpack.c.b16 %v559, %v557
        %v570 = vpack.c.b16 %v560, %v558
        %v571 = vpack.c.b16 %v563, %v561
        %v572 = vpack.c.b16 %v564, %v562
        %vm581 = vcmask 523264
        %v583 = vsel %vm581, %v539, 0
        %v586 = vsel %vm581, %v540, 0
        %588 = vmatprep.subr.bf16.mxu0 %v566
        %589 = vmatpush1.bf16.msra.mxu0 %v565
        %590 = vmatprep.subr.bf16.mxu0 %v568
        %591 = vmatpush1.bf16.msra.mxu0 %v567
        %592 = vmatprep.subr.bf16.mxu0 %v570
        %593 = vmatpush1.bf16.msra.mxu0 %v569
        %594 = vmatprep.subr.bf16.mxu0 %v572
        %595 = vmatpush1.bf16.msra.mxu0 %v571
        %596 = vmatprep.subr.bf16.mxu0 0
        %597 = vmatpush1.bf16.msra.mxu0 0
        %598 = vmatprep.subr.bf16.mxu0 0
        %599 = vmatpush1.bf16.msra.mxu0 0
        %600 = vmatprep.subr.bf16.mxu0 0
        %601 = vmatpush1.bf16.msra.mxu0 0
        %602 = vmatprep.subr.bf16.mxu0 0
        %603 = vmatpush1.bf16.msra.mxu0 0
        %604 = vmatprep.subr.bf16.mxu0 0
        %605 = vmatpush1.bf16.msra.mxu0 0
        %606 = vmatprep.subr.bf16.mxu0 0
        %607 = vmatpush1.bf16.msra.mxu0 0
        %608 = vmatprep.subr.bf16.mxu0 0
        %609 = vmatpush1.bf16.msra.mxu0 0
        %610 = vmatprep.subr.bf16.mxu0 0
        %611 = vmatpush1.bf16.msra.mxu0 0
        %612 = vmatprep.subr.bf16.mxu0 0
        %613 = vmatpush1.bf16.msra.mxu0 0
        %614 = vmatprep.subr.bf16.mxu0 0
        %615 = vmatpush1.bf16.msra.mxu0 0
        %616 = vmatprep.subr.bf16.mxu0 0
        %617 = vmatpush1.bf16.msra.mxu0 0
        %618 = vmatprep.subr.bf16.mxu0 0
        %619 = vmatpush1.bf16.msra.mxu0 0
        %620 = vmatprep.mubr.bf16.mxu0 0
        %621 = vmatmul.mubr.bf16.gmra.mrb[0].mxu0 %v583
        %v622 = vpop.f32.mrb[0].mxu0
        %v623 = vadd.f32 0.0, %v622
        %v624 = vpop.f32.mrb[0].mxu0
        %v625 = vadd.f32 0.0, %v624
        %v626 = vpop.f32.mrb[0].mxu0
        %v627 = vadd.f32 0.0, %v626
        %v628 = vpop.f32.mrb[0].mxu0
        %v629 = vadd.f32 0.0, %v628
        %630 = vmatprep.mubr.bf16.mxu0 0
        %631 = vmatmul.mubr.bf16.gmra.mrb[0].mxu0 %v586
        %v632 = vpop.f32.mrb[0].mxu0
        %v633 = vadd.f32 0.0, %v632
        %v634 = vpop.f32.mrb[0].mxu0
        %v635 = vadd.f32 0.0, %v634
        %v636 = vpop.f32.mrb[0].mxu0
        %v637 = vadd.f32 0.0, %v636
        %v638 = vpop.f32.mrb[0].mxu0
        %v639 = vadd.f32 0.0, %v638
        %640 = vdwg.mxu0
        %v641 = vadd.f32 %v430, %v623
        %v642 = vadd.f32 %v432, %v625
        %v643 = vadd.f32 %v434, %v627
        %v644 = vadd.f32 %v436, %v629
        %v645 = vadd.f32 %v440, %v633
        %v646 = vadd.f32 %v442, %v635
        %v647 = vadd.f32 %v444, %v637
        %v648 = vadd.f32 %v446, %v639
        %v649 = vmul.f32 %v641, 0.2
        %v650 = vmul.f32 %v642, 0.2
        %v651 = vmul.f32 %v643, 0.2
        %v652 = vmul.f32 %v644, 0.2
        %v653 = vmul.f32 %v645, 0.2
        %v654 = vmul.f32 %v646, 0.2
        %v655 = vmul.f32 %v647, 0.2
        %v656 = vmul.f32 %v648, 0.2
        %v657 = vmax.f32 %v641, %v649
        %v658 = vmax.f32 %v642, %v650
        %v659 = vmax.f32 %v643, %v651
        %v660 = vmax.f32 %v644, %v652
        %v661 = vmax.f32 %v645, %v653
        %v662 = vmax.f32 %v646, %v654
        %v663 = vmax.f32 %v647, %v655
        %v664 = vmax.f32 %v648, %v656
        %665 = vst [vmem:[%s299] sm:$0xff] %v657
        %666 = vst [vmem:[%s299 + $0x8] sm:$0xff] %v658
        %667 = vst [vmem:[%s299 + $0x10] sm:$0xff] %v659
        %668 = vst [vmem:[%s299 + $0x18] sm:$0xff] %v660
        %669 = vst [vmem:[%s299 + $0x20] sm:$0xff] %v661
        %670 = vst [vmem:[%s299 + $0x28] sm:$0xff] %v662
        %671 = vst [vmem:[%s299 + $0x30] sm:$0xff] %v663
        %672 = vst [vmem:[%s299 + $0x38] sm:$0xff] %v664
        %s673 = sand.u32 %s187, 1
        %s674 = scalar_lea.sflag [#allocation4], %s673
        %s675 = sand.u32 %s187, 1
        %s676 = smul.addr %s675, 64
        %s677 = scalar_lea.vmem [#allocation5], %s676
        // Predicated region
        $region53: #{tpu_custom_call.1} parent=47 // pred_check
          %p678 = pneg %p197
        $region54: #{tpu_custom_call.1} parent=47 // pred_check_branch
          %680 = sbr.rel (%p678) target = $region56
        $region55: #{tpu_custom_call.1} parent=47 // pred_region
          %s682 = ssub.s32 1024, 1024
          %683 = vsyncadd %s674, %s682
          %s684 = smul.addr %s22, 8
          %s685 = smul.addr %s684, 128
          %s686 = scalar_lea.hbm %s7, %s685
          %s687 = sshll.u32 %s677, 4
          %s688 = int_to_ptr.vmem [resolvable:$true] %s687
          %693 = dma.vmem_to_hbm [thread:$0]  %s688, 1024, %s686, %s674, 256, 256, 16
        $region56: #{tpu_custom_call.1} parent=47 // pred_fallthru
          _
      $region48: #{tpu_custom_call.1} parent=5 // pred_fallthru
        _
      %p694 = scmp.le.s32.totalorder 2, %s17
      // Predicated region
      $region57: #{tpu_custom_call.1} parent=5 // pred_check
        %p695 = pneg %p694
      $region58: #{tpu_custom_call.1} parent=5 // pred_check_branch
        %697 = sbr.rel (%p695) target = $region60
      $region59: #{tpu_custom_call.1} parent=5 // pred_region
        %s698 = ssub.s32 %s17, 2
        // Predicated region
        $region61: #{tpu_custom_call.1} parent=59 // pred_check
          %p699 = pneg %p203
        $region62: #{tpu_custom_call.1} parent=59 // pred_check_branch
          %701 = sbr.rel (%p699) target = $region64
        $region63: #{tpu_custom_call.1} parent=59 // pred_region
          %s702 = sand.u32 %s188, 1
          %s703 = scalar_lea.sflag [#allocation4], %s702
          %s704 = sand.u32 %s188, 1
          %s705 = smul.addr %s704, 64
          %s706 = scalar_lea.vmem [#allocation5], %s705
          %707 = dma.done %s703, 1024
        $region64: #{tpu_custom_call.1} parent=59 // pred_fallthru
          _
      $region60: #{tpu_custom_call.1} parent=5 // pred_fallthru
        _
    $region6: #{tpu_custom_call.1} parent=1 // loop_footer
      %s21 = sadd.s32 1, %s17
    $region7: #{tpu_custom_call.1} parent=1 // loop_footer_branch
      %16 = sbr.rel target = $region3
    $region8: #{tpu_custom_call.1} parent=1 // loop_exit
      _
    %708 = vsyncpa [#allocation3], 1
    %s709 = scalar_lea.sflag [#allocation3], 1
    %710 = vsyncpa %s709, 1
    %711 = vsyncpa [#allocation4], 1
    %s712 = scalar_lea.sflag [#allocation4], 1
    %713 = vsyncpa %s712, 1

</llo_original>
